<compile_context>
chip_gen: v7x
topology: tpu7x:2x2x1
jax: 0.10.0
libtpu: 0.0.40
codegen_flags: <defaults>
</compile_context>

<pallas_src>
import jax
import jax.numpy as jnp
from jax.experimental import pallas as pl
from jax.experimental.pallas import tpu as pltpu

K = 10          # pool kernel size
S = 1           # stride
P = 10          # padding
MIN_V = 1.0     # clamp_min value
MAX_V = 631.0   # clamp_max value


def _sliding_max(a, axis, k):
    """Window-`k` sliding max along `axis` via a log-tree of shifted maxima.

    Output length along `axis` is n - k + 1 (valid positions only). Uses
    ~ceil(log2(k)) + 1 maxima / slice pairs instead of k - 1 (10x fewer ops for k=10).
    Shifts are static value slices -> lane/sublane rotates on the XLU slot.
    """
    def window(arr, start, length):
        idx = [slice(None)] * arr.ndim
        idx[axis] = slice(start, start + length)
        return arr[tuple(idx)]

    win = 1
    while win * 2 <= k:
        n = a.shape[axis]
        a = jnp.maximum(window(a, 0, n - win), window(a, win, n - win))
        win *= 2
    if win < k:
        rem = k - win
        n = a.shape[axis]
        a = jnp.maximum(window(a, 0, n - rem), window(a, rem, n - rem))
    return a


def maxpool_clamp_kernel(x_ref, o_ref, pad_ref):
    # x_ref  : (B, H,  W )  unpadded input planes
    # o_ref  : (B, Ho, Wo)  pooled + clamped output planes
    # pad_ref: (B, Hp, Wp)  VMEM scratch holding the -inf padded planes
    _, H, W = x_ref.shape

    # Fuse the -inf padding into the kernel: fill the scratch, drop the data in the
    # interior window. (No padded array ever touches HBM.)
    pad_ref[...] = jnp.full(pad_ref.shape, -jnp.inf, dtype=pad_ref.dtype)
    pad_ref[:, P:P + H, P:P + W] = x_ref[...].astype(pad_ref.dtype)

    xp = pad_ref[...]                       # single load of the padded plane batch

    # Separable 10x10 max: horizontal pass (lane axis) then vertical pass (sublanes).
    m = _sliding_max(xp, axis=2, k=K)       # (B, Hp, Wo)
    m = _sliding_max(m, axis=1, k=K)        # (B, Ho, Wo)

    # clamp_min(1) then clamp_max(631)  ==  clip(m, MIN_V, MAX_V)
    o_ref[...] = jnp.clip(m, MIN_V, MAX_V).astype(o_ref.dtype)


def model_forward(x):
    """x: (N, C, H, W) float32 -> (N, C, H + 2P - K + 1, W + 2P - K + 1)."""
    N, C, H, W = x.shape
    Hp, Wp = H + 2 * P, W + 2 * P
    Ho = (Hp - K) // S + 1
    Wo = (Wp - K) // S + 1
    NC = N * C

    # All planes in (at most) 2 grid steps: amortizes per-step overhead / tiny DMAs,
    # while 2 "parallel" steps keep both TensorCores busy on v7x.
    G = 2 if (NC % 2 == 0 and NC >= 2) else 1
    BP = NC // G

    x_flat = x.reshape(NC, H, W)

    out = pl.pallas_call(
        maxpool_clamp_kernel,
        out_shape=jax.ShapeDtypeStruct((NC, Ho, Wo), x.dtype),
        grid_spec=pltpu.PrefetchScalarGridSpec(
            num_scalar_prefetch=0,
            grid=(G,),
            in_specs=[pl.BlockSpec((BP, H, W), lambda i: (i, 0, 0))],
            out_specs=pl.BlockSpec((BP, Ho, Wo), lambda i: (i, 0, 0)),
            scratch_shapes=[pltpu.VMEM((BP, Hp, Wp), jnp.float32)],
        ),
        compiler_params=pltpu.CompilerParams(
            dimension_semantics=("parallel",)),
    )(x_flat)

    return out.reshape(N, C, Ho, Wo)


if __name__ == "__main__":
    # Small NCHW shape consistent with the module's input (original: 1x3x192x811).
    key = jax.random.PRNGKey(0)
    x = jax.random.normal(key, (2, 3, 16, 24), dtype=jnp.float32) * 3.0

    y = model_forward(x)
    jax.block_until_ready(y)

    # Pure-JAX reference with identical semantics.
    xp = jnp.pad(x, ((0, 0), (0, 0), (P, P), (P, P)), constant_values=-jnp.inf)
    Ho = x.shape[2] + 2 * P - K + 1
    Wo = x.shape[3] + 2 * P - K + 1
    ref = jnp.full((x.shape[0], x.shape[1], Ho, Wo), -jnp.inf, dtype=jnp.float32)
    for kh in range(K):
        for kw in range(K):
            ref = jnp.maximum(ref, xp[:, :, kh:kh + Ho, kw:kw + Wo])
    ref = jnp.clip(ref, MIN_V, MAX_V)

    assert y.shape == ref.shape, (y.shape, ref.shape)
    assert jnp.allclose(y, ref, atol=1e-6), "mismatch vs reference"
    print("KERNEL_OK")
</pallas_src>

<mosaic_0001>
module attributes {stable_mosaic.version = 11 : i64} {
  func.func @maxpool_clamp_kernel(%arg0: i32, %arg1: memref<3x16x24xf32, #tpu.memory_space<vmem>>, %arg2: memref<3x27x35xf32, #tpu.memory_space<vmem>>, %arg3: memref<3x36x44xf32, #tpu.memory_space<vmem>>) attributes {dimension_semantics = [#tpu.dimension_semantics<parallel>], iteration_bounds = array<i64: 2>, scalar_prefetch = 0 : i64, scratch_operands = 1 : i64, tpu.core_type = #tpu.core_type<tc>, window_params = [{transform_indices = @transform_0, window_bounds = array<i64: 3, 16, 24>}, {transform_indices = @transform_1, window_bounds = array<i64: 3, 27, 35>}]} {
    %cst = arith.constant 0xFF800000 : f32
    %0 = vector.broadcast %cst : f32 to vector<3x36x44xf32>
    %c0 = arith.constant 0 : index
    %c0_0 = arith.constant 0 : index
    %c0_1 = arith.constant 0 : index
    %1 = vector.load %arg3[%c0, %c0_0, %c0_1] : memref<3x36x44xf32, #tpu.memory_space<vmem>>, vector<3x36x44xf32>
    tpu.vector_store %arg3[%c0, %c0_0, %c0_1], %0 {strides = array<i32>} : memref<3x36x44xf32, #tpu.memory_space<vmem>>, vector<3x36x44xf32>,
    %c0_2 = arith.constant 0 : index
    %c0_3 = arith.constant 0 : index
    %c0_4 = arith.constant 0 : index
    %2 = vector.load %arg1[%c0_2, %c0_3, %c0_4] : memref<3x16x24xf32, #tpu.memory_space<vmem>>, vector<3x16x24xf32>
    %c0_5 = arith.constant 0 : index
    %c10 = arith.constant 10 : index
    %c10_6 = arith.constant 10 : index
    %3 = vector.load %arg3[%c0_5, %c10, %c10_6] : memref<3x36x44xf32, #tpu.memory_space<vmem>>, vector<3x16x24xf32>
    tpu.vector_store %arg3[%c0_5, %c10, %c10_6], %2 {strides = array<i32>} : memref<3x36x44xf32, #tpu.memory_space<vmem>>, vector<3x16x24xf32>,
    %c0_7 = arith.constant 0 : index
    %c0_8 = arith.constant 0 : index
    %c0_9 = arith.constant 0 : index
    %4 = vector.load %arg3[%c0_7, %c0_8, %c0_9] : memref<3x36x44xf32, #tpu.memory_space<vmem>>, vector<3x36x44xf32>
    %5 = vector.extract_strided_slice %4 {offsets = [0, 0, 0], sizes = [3, 36, 43], strides = [1, 1, 1]} : vector<3x36x44xf32> to vector<3x36x43xf32>
    %6 = vector.extract_strided_slice %4 {offsets = [0, 0, 1], sizes = [3, 36, 43], strides = [1, 1, 1]} : vector<3x36x44xf32> to vector<3x36x43xf32>
    %7 = arith.maximumf %5, %6 : vector<3x36x43xf32>
    %8 = vector.extract_strided_slice %7 {offsets = [0, 0, 0], sizes = [3, 36, 41], strides = [1, 1, 1]} : vector<3x36x43xf32> to vector<3x36x41xf32>
    %9 = vector.extract_strided_slice %7 {offsets = [0, 0, 2], sizes = [3, 36, 41], strides = [1, 1, 1]} : vector<3x36x43xf32> to vector<3x36x41xf32>
    %10 = arith.maximumf %8, %9 : vector<3x36x41xf32>
    %11 = vector.extract_strided_slice %10 {offsets = [0, 0, 0], sizes = [3, 36, 37], strides = [1, 1, 1]} : vector<3x36x41xf32> to vector<3x36x37xf32>
    %12 = vector.extract_strided_slice %10 {offsets = [0, 0, 4], sizes = [3, 36, 37], strides = [1, 1, 1]} : vector<3x36x41xf32> to vector<3x36x37xf32>
    %13 = arith.maximumf %11, %12 : vector<3x36x37xf32>
    %14 = vector.extract_strided_slice %13 {offsets = [0, 0, 0], sizes = [3, 36, 35], strides = [1, 1, 1]} : vector<3x36x37xf32> to vector<3x36x35xf32>
    %15 = vector.extract_strided_slice %13 {offsets = [0, 0, 2], sizes = [3, 36, 35], strides = [1, 1, 1]} : vector<3x36x37xf32> to vector<3x36x35xf32>
    %16 = arith.maximumf %14, %15 : vector<3x36x35xf32>
    %17 = vector.extract_strided_slice %16 {offsets = [0, 0, 0], sizes = [3, 35, 35], strides = [1, 1, 1]} : vector<3x36x35xf32> to vector<3x35x35xf32>
    %18 = vector.extract_strided_slice %16 {offsets = [0, 1, 0], sizes = [3, 35, 35], strides = [1, 1, 1]} : vector<3x36x35xf32> to vector<3x35x35xf32>
    %19 = arith.maximumf %17, %18 : vector<3x35x35xf32>
    %20 = vector.extract_strided_slice %19 {offsets = [0, 0, 0], sizes = [3, 33, 35], strides = [1, 1, 1]} : vector<3x35x35xf32> to vector<3x33x35xf32>
    %21 = vector.extract_strided_slice %19 {offsets = [0, 2, 0], sizes = [3, 33, 35], strides = [1, 1, 1]} : vector<3x35x35xf32> to vector<3x33x35xf32>
    %22 = arith.maximumf %20, %21 : vector<3x33x35xf32>
    %23 = vector.extract_strided_slice %22 {offsets = [0, 0, 0], sizes = [3, 29, 35], strides = [1, 1, 1]} : vector<3x33x35xf32> to vector<3x29x35xf32>
    %24 = vector.extract_strided_slice %22 {offsets = [0, 4, 0], sizes = [3, 29, 35], strides = [1, 1, 1]} : vector<3x33x35xf32> to vector<3x29x35xf32>
    %25 = arith.maximumf %23, %24 : vector<3x29x35xf32>
    %26 = vector.extract_strided_slice %25 {offsets = [0, 0, 0], sizes = [3, 27, 35], strides = [1, 1, 1]} : vector<3x29x35xf32> to vector<3x27x35xf32>
    %27 = vector.extract_strided_slice %25 {offsets = [0, 2, 0], sizes = [3, 27, 35], strides = [1, 1, 1]} : vector<3x29x35xf32> to vector<3x27x35xf32>
    %28 = arith.maximumf %26, %27 : vector<3x27x35xf32>
    %cst_10 = arith.constant 1.000000e+00 : f32
    %cst_11 = arith.constant 6.310000e+02 : f32
    %29 = vector.broadcast %cst_10 : f32 to vector<3x27x35xf32>
    %30 = arith.maximumf %29, %28 : vector<3x27x35xf32>
    %31 = vector.broadcast %cst_11 : f32 to vector<3x27x35xf32>
    %32 = arith.minimumf %31, %30 : vector<3x27x35xf32>
    %c0_12 = arith.constant 0 : index
    %c0_13 = arith.constant 0 : index
    %c0_14 = arith.constant 0 : index
    %33 = vector.load %arg2[%c0_12, %c0_13, %c0_14] : memref<3x27x35xf32, #tpu.memory_space<vmem>>, vector<3x27x35xf32>
    tpu.vector_store %arg2[%c0_12, %c0_13, %c0_14], %32 {strides = array<i32>} : memref<3x27x35xf32, #tpu.memory_space<vmem>>, vector<3x27x35xf32>,
    return
  }
  func.func @transform_0(%arg0: i32) -> (i32, i32, i32) {
    %c0_i32 = arith.constant 0 : i32
    %c0_i32_0 = arith.constant 0 : i32
    %c0_i32_1 = arith.constant 0 : i32
    return %arg0, %c0_i32, %c0_i32_0 : i32, i32, i32
  }
  func.func @transform_1(%arg0: i32) -> (i32, i32, i32) {
    %c0_i32 = arith.constant 0 : i32
    %c0_i32_0 = arith.constant 0 : i32
    %c0_i32_1 = arith.constant 0 : i32
    return %arg0, %c0_i32, %c0_i32_0 : i32, i32, i32
  }
}

</mosaic_0001>

<llo_original>
// kernel: tpu_custom_call.1
$region0: #{tpu_custom_call.1}
  #allocation0 [shape = 'u32[]', space=smem, size = 0x4, offset = 0x4, fixed_abs, tag = 'smem constant byte address 0x4 - core index']
  #allocation1 [shape = 'u32[144,128]{1,0:T(1,128)}', space=vmem, size = 0x12000, scoped, tag = 'internal scratch']
  #allocation2 [shape = 'f32[3,36,44]{2,1,0:T(8,128)}', space=vmem, size = 0xf000, scoped, tag = 'scratch operand']
  %s0 = inlined_call_operand.hbm [shape: f32[6,16,24], index: 0, kind: input, shape index: {}]
  %s1 = inlined_call_operand.hbm [shape: f32[6,27,35], index: 1, kind: output, shape index: {}]
  %s2 = sld [smem:[#allocation0]]
  $region41: #{tpu_custom_call.1} parent=0
    _
  %s4 = ssub.s32 1, %s2
  %s5 = scalar_select 0, %s4, %s2
  $region1: #{tpu_custom_call.1} parent=0
    #allocation3 [shape = 'u8[49152]{0}', space=vmem, size = 0xc000, scoped, tag = 'input window, operand 0']
    #allocation4 [shape = 's32[2]{0}', space=sflag, size = 0x8, scoped, tag = 'scoped memory for tpu_custom_call.1']
    #allocation5 [shape = 's32[2]{0}', space=sflag, size = 0x8, scoped, tag = 'scoped memory for tpu_custom_call.1']
    #allocation6 [shape = 'u8[98304]{0}', space=vmem, size = 0x18000, scoped, tag = 'output window, operand 0']
    %6 = vsyncpa [#allocation4], 0
    %s7 = scalar_lea.sflag [#allocation4], 1
    %8 = vsyncpa %s7, 0
    %9 = vsyncpa [#allocation5], 0
    %s10 = scalar_lea.sflag [#allocation5], 1
    %11 = vsyncpa %s10, 0
    loop: start=0, step=1, limit=4
    $region2: #{tpu_custom_call.1} parent=1 // loop_pre_header
      _
    $region3: #{tpu_custom_call.1} parent=1 // loop_header
      %s13 = sphi 0, %s17
      %p14 = scmp.ge.s32.totalorder %s13, 4
      %s23 = sphi 0, %s25
      %s26 = sphi 0, %s23
      %s27 = sphi 0, %s26
      %s43 = sphi 0, %s27
      %s49 = sphi 0, %s51
      %s52 = sphi 0, %s49
      %s53 = sphi 0, %s52
      %s69 = sphi 0, %s53
    $region4: #{tpu_custom_call.1} parent=1 // loop_header_branch
      %16 = sbr.rel (%p14) target = $region8
    $region5: #{tpu_custom_call.1} parent=1 // loop_body
      %s18 = ssub.s32 %s13, 1
      %s19 = ssub.s32 %s13, 2
      %s20 = sadd.s32 %s13, 1
      %s21 = ssub.s32 %s13, %s20
      %p22 = scmp.eq.s32.totalorder %s21, 0
      %s24 = sadd.s32 %s23, 1
      %s25 = scalar_select %p22, %s23, %s24
      %p28 = pneg %p22
      %p29 = scmp.eq.s32.totalorder %s13, 1
      %p30 = por %p28, %p29
      %p31 = scmp.ne.s32.totalorder %s23, %s26
      %p32 = scmp.eq.s32.totalorder %s13, 0
      %p33 = por %p31, %p32
      %p34 = scmp.ne.s32.totalorder %s23, %s26
      %p35 = scmp.eq.s32.totalorder %s18, 1
      %p36 = por %p34, %p35
      %p37 = scmp.ne.s32.totalorder %s26, %s27
      %p38 = scmp.eq.s32.totalorder %s18, 0
      %p39 = por %p37, %p38
      %p40 = scmp.ne.s32.totalorder %s26, %s27
      %p41 = scmp.eq.s32.totalorder %s19, 1
      %p42 = por %p40, %p41
      %p44 = scmp.ne.s32.totalorder %s27, %s43
      %p45 = scmp.eq.s32.totalorder %s19, 0
      %p46 = por %p44, %p45
      %s47 = ssub.s32 %s13, %s20
      %p48 = scmp.eq.s32.totalorder %s47, 0
      %s50 = sadd.s32 %s49, 1
      %s51 = scalar_select %p48, %s49, %s50
      %p54 = pneg %p48
      %p55 = scmp.eq.s32.totalorder %s13, 1
      %p56 = por %p54, %p55
      %p57 = scmp.ne.s32.totalorder %s49, %s52
      %p58 = scmp.eq.s32.totalorder %s13, 0
      %p59 = por %p57, %p58
      %p60 = scmp.ne.s32.totalorder %s49, %s52
      %p61 = scmp.eq.s32.totalorder %s18, 1
      %p62 = por %p60, %p61
      %p63 = scmp.ne.s32.totalorder %s52, %s53
      %p64 = scmp.eq.s32.totalorder %s18, 0
      %p65 = por %p63, %p64
      %p66 = scmp.ne.s32.totalorder %s52, %s53
      %p67 = scmp.eq.s32.totalorder %s19, 1
      %p68 = por %p66, %p67
      %p70 = scmp.ne.s32.totalorder %s53, %s69
      %p71 = scmp.eq.s32.totalorder %s19, 0
      %p72 = por %p70, %p71
      %p73 = scmp.le.s32.totalorder 1, %s13
      %p74 = scmp.lt.s32.totalorder %s13, 3
      %p75 = pnand %p73, %p74
      %p76 = pneg %p75
      // Predicated region
      $region9: #{tpu_custom_call.1} parent=5 // pred_check
        _
      $region10: #{tpu_custom_call.1} parent=5 // pred_check_branch
        %78 = sbr.rel (%p75) target = $region12
      $region11: #{tpu_custom_call.1} parent=5 // pred_region
        %s79 = ssub.s32 %s13, 1
      $region12: #{tpu_custom_call.1} parent=5 // pred_fallthru
        _
      %p80 = scmp.lt.s32.totalorder %s13, 2
      // Predicated region
      $region13: #{tpu_custom_call.1} parent=5 // pred_check
        %p81 = pneg %p80
      $region14: #{tpu_custom_call.1} parent=5 // pred_check_branch
        %83 = sbr.rel (%p81) target = $region16
      $region15: #{tpu_custom_call.1} parent=5 // pred_region
        // Predicated region
        $region17: #{tpu_custom_call.1} parent=15 // pred_check
          %p84 = pneg %p33
        $region18: #{tpu_custom_call.1} parent=15 // pred_check_branch
          %86 = sbr.rel (%p84) target = $region20
        $region19: #{tpu_custom_call.1} parent=15 // pred_region
          %s87 = sand.u32 %s23, 1
          %s88 = scalar_lea.sflag [#allocation4], %s87
          %s89 = sand.u32 %s23, 1
          %s90 = smul.addr %s89, 48
          %s91 = scalar_lea.vmem [#allocation3], %s90
          %s92 = smul.u32 3, %s13
          %s94 = ssub.s32 768, 768
          %95 = vsyncadd %s88, %s94
          %s96 = smul.addr %s92, 2
          %s97 = smul.addr %s96, 128
          %s98 = scalar_lea.hbm %s0, %s97
          %s99 = sshll.u32 %s91, 4
          %s100 = int_to_ptr.vmem [resolvable:$true] %s99
          %105 = dma.hbm_to_vmem [thread:$0]  %s98, 768, %s100, %s88, 128, 128, 8
        $region20: #{tpu_custom_call.1} parent=15 // pred_fallthru
          _
      $region16: #{tpu_custom_call.1} parent=5 // pred_fallthru
        _
      %p106 = scmp.le.s32.totalorder 1, %s13
      %p107 = scmp.lt.s32.totalorder %s13, 3
      %p108 = pnand %p106, %p107
      %p109 = pneg %p108
      // Predicated region
      $region21: #{tpu_custom_call.1} parent=5 // pred_check
        _
      $region22: #{tpu_custom_call.1} parent=5 // pred_check_branch
        %111 = sbr.rel (%p108) target = $region24
      $region23: #{tpu_custom_call.1} parent=5 // pred_region
        %s112 = ssub.s32 %s13, 1
        %s113 = sand.u32 %s26, 1
        %s114 = scalar_lea.sflag [#allocation4], %s113
        %s115 = sand.u32 %s26, 1
        %s116 = smul.addr %s115, 48
        %s117 = scalar_lea.vmem [#allocation3], %s116
        // Predicated region
        $region25: #{tpu_custom_call.1} parent=23 // pred_check
          %p118 = pneg %p39
        $region26: #{tpu_custom_call.1} parent=23 // pred_check_branch
          %120 = sbr.rel (%p118) target = $region28
        $region27: #{tpu_custom_call.1} parent=23 // pred_region
          %121 = dma.done %s114, 768
        $region28: #{tpu_custom_call.1} parent=23 // pred_fallthru
          _
        %s122 = sand.u32 %s26, 1
        %s123 = scalar_lea.sflag [#allocation4], %s122
        %s124 = sand.u32 %s26, 1
        %s125 = smul.addr %s124, 48
        %s126 = scalar_lea.vmem [#allocation3], %s125
        %p127 = pneg %p39
        %p128 = pneg %p36
        %p129 = pneg %p65
        %p130 = pneg %p62
        %s131 = sand.u32 %s52, 1
        %s132 = scalar_lea.sflag [#allocation5], %s131
        %s133 = sand.u32 %s52, 1
        %s134 = smul.addr %s133, 96
        %s135 = scalar_lea.vmem [#allocation6], %s134
        %s136 = smul.u32 3, %s18
        %s137 = smul.u32 3, %s18
        %vm138 = vcmask 359424
        %139 = vst.msk [vmem:[#allocation2] sm:$0xff] %vm138, -inf
        %140 = vst.msk [vmem:[#allocation2 + $0x8] sm:$0xff] %vm138, -inf
        %141 = vst.msk [vmem:[#allocation2 + $0x10] sm:$0xff] %vm138, -inf
        %142 = vst.msk [vmem:[#allocation2 + $0x18] sm:$0xff] %vm138, -inf
        %vm143 = vcmask 355328
        %144 = vst.msk [vmem:[#allocation2 + $0x20] sm:$0xf] %vm143, -inf
        %145 = vst.msk [vmem:[#allocation2 + $0x28] sm:$0xff] %vm138, -inf
        %146 = vst.msk [vmem:[#allocation2 + $0x30] sm:$0xff] %vm138, -inf
        %147 = vst.msk [vmem:[#allocation2 + $0x38] sm:$0xff] %vm138, -inf
        %148 = vst.msk [vmem:[#allocation2 + $0x40] sm:$0xff] %vm138, -inf
        %149 = vst.msk [vmem:[#allocation2 + $0x48] sm:$0xf] %vm143, -inf
        %150 = vst.msk [vmem:[#allocation2 + $0x50] sm:$0xff] %vm138, -inf
        %151 = vst.msk [vmem:[#allocation2 + $0x58] sm:$0xff] %vm138, -inf
        %152 = vst.msk [vmem:[#allocation2 + $0x60] sm:$0xff] %vm138, -inf
        %153 = vst.msk [vmem:[#allocation2 + $0x68] sm:$0xff] %vm138, -inf
        %154 = vst.msk [vmem:[#allocation2 + $0x70] sm:$0xf] %vm143, -inf
        %v155 = vld [vmem:[%s117] sm:$0xff]
        %v156 = vld [vmem:[%s117 + $0x8] sm:$0xff]
        %v157 = vld [vmem:[%s117 + $0x10] sm:$0xff]
        %v158 = vld [vmem:[%s117 + $0x18] sm:$0xff]
        %v159 = vld [vmem:[%s117 + $0x20] sm:$0xff]
        %v160 = vld [vmem:[%s117 + $0x28] sm:$0xff]
        %167 = vrot.lane.b32.xlu0 %v155, 10
        %v168 = vpop.permute.xlu0 %167
        %169 = vrot.lane.b32.xlu0 %v156, 10
        %v170 = vpop.permute.xlu0 %169
        %171 = vrot.lane.b32.xlu0 %v157, 10
        %v172 = vpop.permute.xlu0 %171
        %173 = vrot.lane.b32.xlu0 %v158, 10
        %v174 = vpop.permute.xlu0 %173
        %175 = vrot.lane.b32.xlu0 %v159, 10
        %v176 = vpop.permute.xlu0 %175
        %177 = vrot.lane.b32.xlu0 %v160, 10
        %v178 = vpop.permute.xlu0 %177
        %vm185 = vcmask 277584
        %186 = vst.msk [vmem:[#allocation2 + $0xa] sm:$0xff] %vm185, %v168
        %187 = vst.msk [vmem:[#allocation2 + $0x12] sm:$0xff] %vm185, %v170
        %188 = vst.msk [vmem:[#allocation2 + $0x32] sm:$0xff] %vm185, %v172
        %189 = vst.msk [vmem:[#allocation2 + $0x3a] sm:$0xff] %vm185, %v174
        %190 = vst.msk [vmem:[#allocation2 + $0x5a] sm:$0xff] %vm185, %v176
        %191 = vst.msk [vmem:[#allocation2 + $0x62] sm:$0xff] %vm185, %v178
        %v192 = vld [vmem:[#allocation2] sm:$0xff]
        %v193 = vld [vmem:[#allocation2 + $0x8] sm:$0xff]
        %v194 = vld [vmem:[#allocation2 + $0x10] sm:$0xff]
        %v195 = vld [vmem:[#allocation2 + $0x18] sm:$0xff]
        %v196 = vld [vmem:[#allocation2 + $0x20] sm:$0xf]
        %v197 = vld [vmem:[#allocation2 + $0x28] sm:$0xff]
        %v198 = vld [vmem:[#allocation2 + $0x30] sm:$0xff]
        %v199 = vld [vmem:[#allocation2 + $0x38] sm:$0xff]
        %v200 = vld [vmem:[#allocation2 + $0x40] sm:$0xff]
        %v201 = vld [vmem:[#allocation2 + $0x48] sm:$0xf]
        %v202 = vld [vmem:[#allocation2 + $0x50] sm:$0xff]
        %v203 = vld [vmem:[#allocation2 + $0x58] sm:$0xff]
        %v204 = vld [vmem:[#allocation2 + $0x60] sm:$0xff]
        %v205 = vld [vmem:[#allocation2 + $0x68] sm:$0xff]
        %v206 = vld [vmem:[#allocation2 + $0x70] sm:$0xf]
        %222 = vrot.lane.b32.xlu0 %v192, 127
        %v223 = vpop.permute.xlu0 %222
        %224 = vrot.lane.b32.xlu0 %v193, 127
        %v225 = vpop.permute.xlu0 %224
        %226 = vrot.lane.b32.xlu0 %v194, 127
        %v227 = vpop.permute.xlu0 %226
        %228 = vrot.lane.b32.xlu0 %v195, 127
        %v229 = vpop.permute.xlu0 %228
        %230 = vrot.lane.b32.xlu0 %v196, 127
        %v231 = vpop.permute.xlu0 %230
        %232 = vrot.lane.b32.xlu0 %v197, 127
        %v233 = vpop.permute.xlu0 %232
        %234 = vrot.lane.b32.xlu0 %v198, 127
        %v235 = vpop.permute.xlu0 %234
        %236 = vrot.lane.b32.xlu0 %v199, 127
        %v237 = vpop.permute.xlu0 %236
        %238 = vrot.lane.b32.xlu0 %v200, 127
        %v239 = vpop.permute.xlu0 %238
        %240 = vrot.lane.b32.xlu0 %v201, 127
        %v241 = vpop.permute.xlu0 %240
        %242 = vrot.lane.b32.xlu0 %v202, 127
        %v243 = vpop.permute.xlu0 %242
        %244 = vrot.lane.b32.xlu0 %v203, 127
        %v245 = vpop.permute.xlu0 %244
        %246 = vrot.lane.b32.xlu0 %v204, 127
        %v247 = vpop.permute.xlu0 %246
        %248 = vrot.lane.b32.xlu0 %v205, 127
        %v249 = vpop.permute.xlu0 %248
        %250 = vrot.lane.b32.xlu0 %v206, 127
        %v251 = vpop.permute.xlu0 %250
        %v267 = vmax.f32 %v192, %v223
        %v268 = vmax.f32 %v193, %v225
        %v269 = vmax.f32 %v194, %v227
        %v270 = vmax.f32 %v195, %v229
        %v271 = vmax.f32 %v196, %v231
        %v272 = vmax.f32 %v197, %v233
        %v273 = vmax.f32 %v198, %v235
        %v274 = vmax.f32 %v199, %v237
        %v275 = vmax.f32 %v200, %v239
        %v276 = vmax.f32 %v201, %v241
        %v277 = vmax.f32 %v202, %v243
        %v278 = vmax.f32 %v203, %v245
        %v279 = vmax.f32 %v204, %v247
        %v280 = vmax.f32 %v205, %v249
        %v281 = vmax.f32 %v206, %v251
        %297 = vrot.lane.b32.xlu0 %v267, 126
        %v298 = vpop.permute.xlu0 %297
        %299 = vrot.lane.b32.xlu0 %v268, 126
        %v300 = vpop.permute.xlu0 %299
        %301 = vrot.lane.b32.xlu0 %v269, 126
        %v302 = vpop.permute.xlu0 %301
        %303 = vrot.lane.b32.xlu0 %v270, 126
        %v304 = vpop.permute.xlu0 %303
        %305 = vrot.lane.b32.xlu0 %v271, 126
        %v306 = vpop.permute.xlu0 %305
        %307 = vrot.lane.b32.xlu0 %v272, 126
        %v308 = vpop.permute.xlu0 %307
        %309 = vrot.lane.b32.xlu0 %v273, 126
        %v310 = vpop.permute.xlu0 %309
        %311 = vrot.lane.b32.xlu0 %v274, 126
        %v312 = vpop.permute.xlu0 %311
        %313 = vrot.lane.b32.xlu0 %v275, 126
        %v314 = vpop.permute.xlu0 %313
        %315 = vrot.lane.b32.xlu0 %v276, 126
        %v316 = vpop.permute.xlu0 %315
        %317 = vrot.lane.b32.xlu0 %v277, 126
        %v318 = vpop.permute.xlu0 %317
        %319 = vrot.lane.b32.xlu0 %v278, 126
        %v320 = vpop.permute.xlu0 %319
        %321 = vrot.lane.b32.xlu0 %v279, 126
        %v322 = vpop.permute.xlu0 %321
        %323 = vrot.lane.b32.xlu0 %v280, 126
        %v324 = vpop.permute.xlu0 %323
        %325 = vrot.lane.b32.xlu0 %v281, 126
        %v326 = vpop.permute.xlu0 %325
        %v342 = vmax.f32 %v267, %v298
        %v343 = vmax.f32 %v268, %v300
        %v344 = vmax.f32 %v269, %v302
        %v345 = vmax.f32 %v270, %v304
        %v346 = vmax.f32 %v271, %v306
        %v347 = vmax.f32 %v272, %v308
        %v348 = vmax.f32 %v273, %v310
        %v349 = vmax.f32 %v274, %v312
        %v350 = vmax.f32 %v275, %v314
        %v351 = vmax.f32 %v276, %v316
        %v352 = vmax.f32 %v277, %v318
        %v353 = vmax.f32 %v278, %v320
        %v354 = vmax.f32 %v279, %v322
        %v355 = vmax.f32 %v280, %v324
        %v356 = vmax.f32 %v281, %v326
        %372 = vrot.lane.b32.xlu0 %v342, 124
        %v373 = vpop.permute.xlu0 %372
        %374 = vrot.lane.b32.xlu0 %v343, 124
        %v375 = vpop.permute.xlu0 %374
        %376 = vrot.lane.b32.xlu0 %v344, 124
        %v377 = vpop.permute.xlu0 %376
        %378 = vrot.lane.b32.xlu0 %v345, 124
        %v379 = vpop.permute.xlu0 %378
        %380 = vrot.lane.b32.xlu0 %v346, 124
        %v381 = vpop.permute.xlu0 %380
        %382 = vrot.lane.b32.xlu0 %v347, 124
        %v383 = vpop.permute.xlu0 %382
        %384 = vrot.lane.b32.xlu0 %v348, 124
        %v385 = vpop.permute.xlu0 %384
        %386 = vrot.lane.b32.xlu0 %v349, 124
        %v387 = vpop.permute.xlu0 %386
        %388 = vrot.lane.b32.xlu0 %v350, 124
        %v389 = vpop.permute.xlu0 %388
        %390 = vrot.lane.b32.xlu0 %v351, 124
        %v391 = vpop.permute.xlu0 %390
        %392 = vrot.lane.b32.xlu0 %v352, 124
        %v393 = vpop.permute.xlu0 %392
        %394 = vrot.lane.b32.xlu0 %v353, 124
        %v395 = vpop.permute.xlu0 %394
        %396 = vrot.lane.b32.xlu0 %v354, 124
        %v397 = vpop.permute.xlu0 %396
        %398 = vrot.lane.b32.xlu0 %v355, 124
        %v399 = vpop.permute.xlu0 %398
        %400 = vrot.lane.b32.xlu0 %v356, 124
        %v401 = vpop.permute.xlu0 %400
        %v417 = vmax.f32 %v342, %v373
        %v418 = vmax.f32 %v343, %v375
        %v419 = vmax.f32 %v344, %v377
        %v420 = vmax.f32 %v345, %v379
        %v421 = vmax.f32 %v346, %v381
        %v422 = vmax.f32 %v347, %v383
        %v423 = vmax.f32 %v348, %v385
        %v424 = vmax.f32 %v349, %v387
        %v425 = vmax.f32 %v350, %v389
        %v426 = vmax.f32 %v351, %v391
        %v427 = vmax.f32 %v352, %v393
        %v428 = vmax.f32 %v353, %v395
        %v429 = vmax.f32 %v354, %v397
        %v430 = vmax.f32 %v355, %v399
        %v431 = vmax.f32 %v356, %v401
        %447 = vrot.lane.b32.xlu0 %v417, 126
        %v448 = vpop.permute.xlu0 %447
        %449 = vrot.lane.b32.xlu0 %v418, 126
        %v450 = vpop.permute.xlu0 %449
        %451 = vrot.lane.b32.xlu0 %v419, 126
        %v452 = vpop.permute.xlu0 %451
        %453 = vrot.lane.b32.xlu0 %v420, 126
        %v454 = vpop.permute.xlu0 %453
        %455 = vrot.lane.b32.xlu0 %v421, 126
        %v456 = vpop.permute.xlu0 %455
        %457 = vrot.lane.b32.xlu0 %v422, 126
        %v458 = vpop.permute.xlu0 %457
        %459 = vrot.lane.b32.xlu0 %v423, 126
        %v460 = vpop.permute.xlu0 %459
        %461 = vrot.lane.b32.xlu0 %v424, 126
        %v462 = vpop.permute.xlu0 %461
        %463 = vrot.lane.b32.xlu0 %v425, 126
        %v464 = vpop.permute.xlu0 %463
        %465 = vrot.lane.b32.xlu0 %v426, 126
        %v466 = vpop.permute.xlu0 %465
        %467 = vrot.lane.b32.xlu0 %v427, 126
        %v468 = vpop.permute.xlu0 %467
        %469 = vrot.lane.b32.xlu0 %v428, 126
        %v470 = vpop.permute.xlu0 %469
        %471 = vrot.lane.b32.xlu0 %v429, 126
        %v472 = vpop.permute.xlu0 %471
        %473 = vrot.lane.b32.xlu0 %v430, 126
        %v474 = vpop.permute.xlu0 %473
        %475 = vrot.lane.b32.xlu0 %v431, 126
        %v476 = vpop.permute.xlu0 %475
        %v492 = vmax.f32 %v417, %v448
        %v493 = vmax.f32 %v418, %v450
        %v494 = vmax.f32 %v419, %v452
        %v495 = vmax.f32 %v420, %v454
        %v496 = vmax.f32 %v421, %v456
        %v497 = vmax.f32 %v422, %v458
        %v498 = vmax.f32 %v423, %v460
        %v499 = vmax.f32 %v424, %v462
        %v500 = vmax.f32 %v425, %v464
        %v501 = vmax.f32 %v426, %v466
        %v502 = vmax.f32 %v427, %v468
        %v503 = vmax.f32 %v428, %v470
        %v504 = vmax.f32 %v429, %v472
        %v505 = vmax.f32 %v430, %v474
        %v506 = vmax.f32 %v431, %v476
        %vm522 = vcmask 1046528
        %v523 = vrot.slane %v492, 1
        %v524 = vrot.slane %v493, 1
        %v525 = vsel %vm522, %v523, %v524
        %v526 = vrot.slane %v494, 1
        %v527 = vsel %vm522, %v524, %v526
        %v528 = vrot.slane %v495, 1
        %v529 = vsel %vm522, %v526, %v528
        %v530 = vrot.slane %v496, 1
        %v531 = vsel %vm522, %v528, %v530
        %v532 = vrot.slane %v497, 1
        %v533 = vrot.slane %v498, 1
        %v534 = vsel %vm522, %v532, %v533
        %v535 = vrot.slane %v499, 1
        %v536 = vsel %vm522, %v533, %v535
        %v537 = vrot.slane %v500, 1
        %v538 = vsel %vm522, %v535, %v537
        %v539 = vrot.slane %v501, 1
        %v540 = vsel %vm522, %v537, %v539
        %v541 = vrot.slane %v502, 1
        %v542 = vrot.slane %v503, 1
        %v543 = vsel %vm522, %v541, %v542
        %v544 = vrot.slane %v504, 1
        %v545 = vsel %vm522, %v542, %v544
        %v546 = vrot.slane %v505, 1
        %v547 = vsel %vm522, %v544, %v546
        %v548 = vrot.slane %v506, 1
        %v549 = vsel %vm522, %v546, %v548
        %v565 = vmax.f32 %v492, %v525
        %v566 = vmax.f32 %v493, %v527
        %v567 = vmax.f32 %v494, %v529
        %v568 = vmax.f32 %v495, %v531
        %v569 = vmax.f32 %v496, %v530
        %v570 = vmax.f32 %v497, %v534
        %v571 = vmax.f32 %v498, %v536
        %v572 = vmax.f32 %v499, %v538
        %v573 = vmax.f32 %v500, %v540
        %v574 = vmax.f32 %v501, %v539
        %v575 = vmax.f32 %v502, %v543
        %v576 = vmax.f32 %v503, %v545
        %v577 = vmax.f32 %v504, %v547
        %v578 = vmax.f32 %v505, %v549
        %v579 = vmax.f32 %v506, %v548
        %vm595 = vcmask 1045504
        %v596 = vrot.slane %v565, 2
        %v597 = vrot.slane %v566, 2
        %v598 = vsel %vm595, %v596, %v597
        %v599 = vrot.slane %v567, 2
        %v600 = vsel %vm595, %v597, %v599
        %v601 = vrot.slane %v568, 2
        %v602 = vsel %vm595, %v599, %v601
        %v603 = vrot.slane %v569, 2
        %v604 = vsel %vm595, %v601, %v603
        %v605 = vrot.slane %v570, 2
        %v606 = vrot.slane %v571, 2
        %v607 = vsel %vm595, %v605, %v606
        %v608 = vrot.slane %v572, 2
        %v609 = vsel %vm595, %v606, %v608
        %v610 = vrot.slane %v573, 2
        %v611 = vsel %vm595, %v608, %v610
        %v612 = vrot.slane %v574, 2
        %v613 = vsel %vm595, %v610, %v612
        %v614 = vrot.slane %v575, 2
        %v615 = vrot.slane %v576, 2
        %v616 = vsel %vm595, %v614, %v615
        %v617 = vrot.slane %v577, 2
        %v618 = vsel %vm595, %v615, %v617
        %v619 = vrot.slane %v578, 2
        %v620 = vsel %vm595, %v617, %v619
        %v621 = vrot.slane %v579, 2
        %v622 = vsel %vm595, %v619, %v621
        %v638 = vmax.f32 %v565, %v598
        %v639 = vmax.f32 %v566, %v600
        %v640 = vmax.f32 %v567, %v602
        %v641 = vmax.f32 %v568, %v604
        %v642 = vmax.f32 %v569, %v603
        %v643 = vmax.f32 %v570, %v607
        %v644 = vmax.f32 %v571, %v609
        %v645 = vmax.f32 %v572, %v611
        %v646 = vmax.f32 %v573, %v613
        %v647 = vmax.f32 %v574, %v612
        %v648 = vmax.f32 %v575, %v616
        %v649 = vmax.f32 %v576, %v618
        %v650 = vmax.f32 %v577, %v620
        %v651 = vmax.f32 %v578, %v622
        %v652 = vmax.f32 %v579, %v621
        %vm668 = vcmask 1043456
        %v669 = vrot.slane %v638, 4
        %v670 = vrot.slane %v639, 4
        %v671 = vsel %vm668, %v669, %v670
        %v672 = vrot.slane %v640, 4
        %v673 = vsel %vm668, %v670, %v672
        %v674 = vrot.slane %v641, 4
        %v675 = vsel %vm668, %v672, %v674
        %v676 = vrot.slane %v642, 4
        %v677 = vsel %vm668, %v674, %v676
        %v678 = vrot.slane %v643, 4
        %v679 = vrot.slane %v644, 4
        %v680 = vsel %vm668, %v678, %v679
        %v681 = vrot.slane %v645, 4
        %v682 = vsel %vm668, %v679, %v681
        %v683 = vrot.slane %v646, 4
        %v684 = vsel %vm668, %v681, %v683
        %v685 = vrot.slane %v647, 4
        %v686 = vsel %vm668, %v683, %v685
        %v687 = vrot.slane %v648, 4
        %v688 = vrot.slane %v649, 4
        %v689 = vsel %vm668, %v687, %v688
        %v690 = vrot.slane %v650, 4
        %v691 = vsel %vm668, %v688, %v690
        %v692 = vrot.slane %v651, 4
        %v693 = vsel %vm668, %v690, %v692
        %v694 = vrot.slane %v652, 4
        %v695 = vsel %vm668, %v692, %v694
        %v708 = vmax.f32 %v638, %v671
        %v709 = vmax.f32 %v639, %v673
        %v710 = vmax.f32 %v640, %v675
        %v711 = vmax.f32 %v641, %v677
        %v712 = vmax.f32 %v643, %v680
        %v713 = vmax.f32 %v644, %v682
        %v714 = vmax.f32 %v645, %v684
        %v715 = vmax.f32 %v646, %v686
        %v716 = vmax.f32 %v648, %v689
        %v717 = vmax.f32 %v649, %v691
        %v718 = vmax.f32 %v650, %v693
        %v719 = vmax.f32 %v651, %v695
        %v732 = vrot.slane %v708, 2
        %v733 = vrot.slane %v709, 2
        %v734 = vsel %vm595, %v732, %v733
        %v735 = vrot.slane %v710, 2
        %v736 = vsel %vm595, %v733, %v735
        %v737 = vrot.slane %v711, 2
        %v738 = vsel %vm595, %v735, %v737
        %v739 = vrot.slane %v712, 2
        %v740 = vrot.slane %v713, 2
        %v741 = vsel %vm595, %v739, %v740
        %v742 = vrot.slane %v714, 2
        %v743 = vsel %vm595, %v740, %v742
        %v744 = vrot.slane %v715, 2
        %v745 = vsel %vm595, %v742, %v744
        %v746 = vrot.slane %v716, 2
        %v747 = vrot.slane %v717, 2
        %v748 = vsel %vm595, %v746, %v747
        %v749 = vrot.slane %v718, 2
        %v750 = vsel %vm595, %v747, %v749
        %v751 = vrot.slane %v719, 2
        %v752 = vsel %vm595, %v749, %v751
        %v765 = vmax.f32 %v708, %v734
        %v766 = vmax.f32 %v709, %v736
        %v767 = vmax.f32 %v710, %v738
        %v768 = vmax.f32 %v711, %v737
        %v769 = vmax.f32 %v712, %v741
        %v770 = vmax.f32 %v713, %v743
        %v771 = vmax.f32 %v714, %v745
        %v772 = vmax.f32 %v715, %v744
        %v773 = vmax.f32 %v716, %v748
        %v774 = vmax.f32 %v717, %v750
        %v775 = vmax.f32 %v718, %v752
        %v776 = vmax.f32 %v719, %v751
        %v777 = vmax.f32 %v765, 1.0
        %v778 = vmax.f32 %v766, 1.0
        %v779 = vmax.f32 %v767, 1.0
        %v780 = vmax.f32 %v768, 1.0
        %v781 = vmax.f32 %v769, 1.0
        %v782 = vmax.f32 %v770, 1.0
        %v783 = vmax.f32 %v771, 1.0
        %v784 = vmax.f32 %v772, 1.0
        %v785 = vmax.f32 %v773, 1.0
        %v786 = vmax.f32 %v774, 1.0
        %v787 = vmax.f32 %v775, 1.0
        %v788 = vmax.f32 %v776, 1.0
        %v789 = vmin.f32 %v777, 631.0
        %v790 = vmin.f32 %v778, 631.0
        %v791 = vmin.f32 %v779, 631.0
        %v792 = vmin.f32 %v780, 631.0
        %v793 = vmin.f32 %v781, 631.0
        %v794 = vmin.f32 %v782, 631.0
        %v795 = vmin.f32 %v783, 631.0
        %v796 = vmin.f32 %v784, 631.0
        %v797 = vmin.f32 %v785, 631.0
        %v798 = vmin.f32 %v786, 631.0
        %v799 = vmin.f32 %v787, 631.0
        %v800 = vmin.f32 %v788, 631.0
        %vm801 = vcmask 285696
        %802 = vst.msk [vmem:[%s135] sm:$0xff] %vm801, %v789
        %803 = vst.msk [vmem:[%s135 + $0x8] sm:$0xff] %vm801, %v790
        %804 = vst.msk [vmem:[%s135 + $0x10] sm:$0xff] %vm801, %v791
        %vm805 = vcmask 280576
        %806 = vst.msk [vmem:[%s135 + $0x18] sm:$0x7] %vm805, %v792
        %807 = vst.msk [vmem:[%s135 + $0x20] sm:$0xff] %vm801, %v793
        %808 = vst.msk [vmem:[%s135 + $0x28] sm:$0xff] %vm801, %v794
        %809 = vst.msk [vmem:[%s135 + $0x30] sm:$0xff] %vm801, %v795
        %810 = vst.msk [vmem:[%s135 + $0x38] sm:$0x7] %vm805, %v796
        %811 = vst.msk [vmem:[%s135 + $0x40] sm:$0xff] %vm801, %v797
        %812 = vst.msk [vmem:[%s135 + $0x48] sm:$0xff] %vm801, %v798
        %813 = vst.msk [vmem:[%s135 + $0x50] sm:$0xff] %vm801, %v799
        %814 = vst.msk [vmem:[%s135 + $0x58] sm:$0x7] %vm805, %v800
        %s815 = sand.u32 %s52, 1
        %s816 = scalar_lea.sflag [#allocation5], %s815
        %s817 = sand.u32 %s52, 1
        %s818 = smul.addr %s817, 96
        %s819 = scalar_lea.vmem [#allocation6], %s818
        // Predicated region
        $region29: #{tpu_custom_call.1} parent=23 // pred_check
          %p820 = pneg %p62
        $region30: #{tpu_custom_call.1} parent=23 // pred_check_branch
          %822 = sbr.rel (%p820) target = $region32
        $region31: #{tpu_custom_call.1} parent=23 // pred_region
          %s823 = smul.u32 3, %s18
          %s825 = ssub.s32 1536, 1536
          %826 = vsyncadd %s816, %s825
          %s827 = smul.addr %s823, 4
          %s828 = smul.addr %s827, 128
          %s829 = scalar_lea.hbm %s1, %s828
          %s830 = sshll.u32 %s819, 4
          %s831 = int_to_ptr.vmem [resolvable:$true] %s830
          %836 = dma.vmem_to_hbm [thread:$0]  %s831, 1536, %s829, %s816, 128, 128, 8
        $region32: #{tpu_custom_call.1} parent=23 // pred_fallthru
          _
      $region24: #{tpu_custom_call.1} parent=5 // pred_fallthru
        _
      %p837 = scmp.le.s32.totalorder 2, %s13
      // Predicated region
      $region33: #{tpu_custom_call.1} parent=5 // pred_check
        %p838 = pneg %p837
      $region34: #{tpu_custom_call.1} parent=5 // pred_check_branch
        %840 = sbr.rel (%p838) target = $region36
      $region35: #{tpu_custom_call.1} parent=5 // pred_region
        %s841 = ssub.s32 %s13, 2
        // Predicated region
        $region37: #{tpu_custom_call.1} parent=35 // pred_check
          %p842 = pneg %p68
        $region38: #{tpu_custom_call.1} parent=35 // pred_check_branch
          %844 = sbr.rel (%p842) target = $region40
        $region39: #{tpu_custom_call.1} parent=35 // pred_region
          %s845 = sand.u32 %s53, 1
          %s846 = scalar_lea.sflag [#allocation5], %s845
          %s847 = sand.u32 %s53, 1
          %s848 = smul.addr %s847, 96
          %s849 = scalar_lea.vmem [#allocation6], %s848
          %850 = dma.done %s846, 1536
        $region40: #{tpu_custom_call.1} parent=35 // pred_fallthru
          _
      $region36: #{tpu_custom_call.1} parent=5 // pred_fallthru
        _
    $region6: #{tpu_custom_call.1} parent=1 // loop_footer
      %s17 = sadd.s32 1, %s13
    $region7: #{tpu_custom_call.1} parent=1 // loop_footer_branch
      %12 = sbr.rel target = $region3
    $region8: #{tpu_custom_call.1} parent=1 // loop_exit
      _
    %851 = vsyncpa [#allocation4], 1
    %s852 = scalar_lea.sflag [#allocation4], 1
    %853 = vsyncpa %s852, 1
    %854 = vsyncpa [#allocation5], 1
    %s855 = scalar_lea.sflag [#allocation5], 1
    %856 = vsyncpa %s855, 1

</llo_original>
